<compile_context>
chip_gen: v7x
topology: tpu7x:2x2x1
jax: 0.10.0
libtpu: 0.0.40
codegen_flags: <defaults>
</compile_context>

<pallas_src>
import math

import jax
import jax.numpy as jnp
from jax.experimental import pallas as pl
from jax.experimental.pallas import tpu as pltpu

F32 = jnp.float32
BN_EPS = 1e-5
COS_EPS = 1e-8
# bf16 operands (f32 accumulation) for the (N, N) graph-propagation matmuls.
# Set to jnp.float32 for tighter parity with the f32 PyTorch reference.
GRAPH_MM_DTYPE = jnp.bfloat16

ROW_TILE = 128    # target node-row tile (multiple of 8)
EDGE_TILE = 128   # PEWE edge tile (lane dim, multiple of 128)
OUT_PAD = 128     # classifier logits padded to this lane width (unmasked stores)


# ---------------------------- small helpers ----------------------------

def _row_tile(n, target=ROW_TILE):
    t = min(target, n)
    while t >= 8:
        if n % t == 0 and t % 8 == 0:
            return t
        t -= 8
    return n            # fall back to one full-height tile (still correct)


def _vmem_limit(blocks):
    # blocks: iterable of (block_shape, dtype); each pipelined block is double-buffered.
    need = sum(2 * math.prod(s) * (jnp.finfo(d).bits // 8) for s, d in blocks)
    # TODO(synk): re-derive the cap per TPU generation (v7x physical VMEM is 64 MiB).
    return int(min(max(need + (4 << 20), 32 << 20), 100 << 20))


def _cparams(blocks):
    return pltpu.CompilerParams(
        dimension_semantics=("parallel",),
        vmem_limit_bytes=_vmem_limit(blocks))


def _pad_cols(a, mult):
    pad = (-a.shape[1]) % mult
    return a if pad == 0 else jnp.pad(a, ((0, 0), (0, pad)))


# ---------------------------- Pallas kernels ----------------------------

def embed_kernel(x_ref, w_eies_ref, b_eies_ref, w_de_ref, b_de_ref,
                 eies_ref, recon_ref):
    # eies = X @ [W_EI | W_ES] + [b_EI | b_ES]  -- one wide lane-dense store;
    # the ei / es split happens cheaply in the wrapper.
    eies = (jnp.dot(x_ref[...], w_eies_ref[...], preferred_element_type=F32)
            + b_eies_ref[...])
    eies_ref[...] = eies
    # DE(concat([ei, es])) == eies @ W_DE + b_DE  (no concat materialization)
    recon_ref[...] = (jnp.dot(eies, w_de_ref[...], preferred_element_type=F32)
                      + b_de_ref[...])


def pewe_kernel(ni1_ref, ni2_ref, es1_ref, es2_ref,
                w1t_ref, b1t_ref, w2t_ref, b2t_ref, o_ref):
    # Column-major PEWE: features on sublanes, edges on lanes -> lane-dense (1, TE)
    # output tile.  Eval-mode BN is folded into the second parser linear.
    def parser(ni):
        h = jnp.maximum(
            jnp.dot(w1t_ref[...], ni, preferred_element_type=F32) + b1t_ref[...], 0.0)
        return jnp.dot(w2t_ref[...], h, preferred_element_type=F32) + b2t_ref[...]

    p1 = parser(ni1_ref[...])
    p2 = parser(ni2_ref[...])
    e1 = es1_ref[...]
    e2 = es2_ref[...]
    # cosine of the concatenated [parser_out, es] vectors via partial sums (no concat);
    # each norm is clamped separately (matches torch cosine_similarity eps handling).
    dot12 = (jnp.sum(p1 * p2, axis=0, keepdims=True)
             + jnp.sum(e1 * e2, axis=0, keepdims=True))
    n1 = jnp.sqrt(jnp.sum(p1 * p1, axis=0, keepdims=True)
                  + jnp.sum(e1 * e1, axis=0, keepdims=True))
    n2 = jnp.sqrt(jnp.sum(p2 * p2, axis=0, keepdims=True)
                  + jnp.sum(e2 * e2, axis=0, keepdims=True))
    cos = dot12 / (jnp.maximum(n1, COS_EPS) * jnp.maximum(n2, COS_EPS))
    o_ref[...] = (cos + 1.0) * 0.5


def cheb_hop_kernel(lhat_ref, h_ref, tx1_ref):
    # tx1[rows r] = L_hat[r, :] @ h   (L_hat streamed in bf16 row tiles, f32 accumulation)
    tx1_ref[...] = jnp.dot(lhat_ref[...], h_ref[...].astype(GRAPH_MM_DTYPE),
                           preferred_element_type=F32)


def cheb_mix_kernel(lhat_ref, tx1_full_ref, tx1_tile_ref, h_tile_ref,
                    w0_ref, w1_ref, w2_ref, o_ref):
    # Second Chebyshev hop + feature mix for one row tile.  The recurrence constants
    # (Tx2 = 2*L@Tx1 - Tx0) are folded into the weights (W0' = W0 - W2, W2' = 2*W2),
    # so three accumulating dots replace the [Tx0|Tx1|Tx2] concat + stacked matmul.
    m = jnp.dot(lhat_ref[...], tx1_full_ref[...].astype(GRAPH_MM_DTYPE),
                preferred_element_type=F32)
    z = (jnp.dot(h_tile_ref[...], w0_ref[...], preferred_element_type=F32)
         + jnp.dot(tx1_tile_ref[...], w1_ref[...], preferred_element_type=F32)
         + jnp.dot(m, w2_ref[...], preferred_element_type=F32))
    o_ref[...] = jnp.maximum(z, 0.0)


def make_heads_kernel(num_layers):
    # Both classifier heads for one row tile.  The jumping-knowledge concat is never
    # materialized: jk @ W1 == sum_l h_l @ W1[l*H:(l+1)*H].
    def kernel(*refs):
        ei_ref = refs[0]
        h_refs = refs[1:1 + num_layers]
        w1_refs = refs[1 + num_layers:1 + 2 * num_layers]
        (lb1, lw2, lb2, sw1, sb1, sw2, sb2) = refs[1 + 2 * num_layers:-2]
        label_ref, site_ref = refs[-2:]

        t = lb1[...]
        for l in range(num_layers):
            t = t + jnp.dot(h_refs[l][...], w1_refs[l][...],
                            preferred_element_type=F32)
        t = jnp.maximum(t, 0.0)
        label_ref[...] = jnp.dot(t, lw2[...], preferred_element_type=F32) + lb2[...]

        # site classifier on ei (ReverseLayerF is identity in the forward pass)
        s = jnp.maximum(
            jnp.dot(ei_ref[...], sw1[...], preferred_element_type=F32) + sb1[...], 0.0)
        site_ref[...] = jnp.dot(s, sw2[...], preferred_element_type=F32) + sb2[...]

    return kernel


# ---------------------------- pallas_call wrappers ----------------------------

def _embed_call(fp, x):
    n, in_dim = x.shape
    emb2 = fp["w_eies"].shape[1]
    gin = fp["w_de"].shape[1]
    tn = _row_tile(n)
    blocks = [((tn, in_dim), F32), ((in_dim, emb2), F32), ((1, emb2), F32),
              ((emb2, gin), F32), ((1, gin), F32), ((tn, emb2), F32), ((tn, gin), F32)]
    return pl.pallas_call(
        embed_kernel,
        grid=(n // tn,),
        in_specs=[pl.BlockSpec((tn, in_dim), lambda i: (i, 0)),
                  pl.BlockSpec((in_dim, emb2), lambda i: (0, 0)),
                  pl.BlockSpec((1, emb2), lambda i: (0, 0)),
                  pl.BlockSpec((emb2, gin), lambda i: (0, 0)),
                  pl.BlockSpec((1, gin), lambda i: (0, 0))],
        out_specs=(pl.BlockSpec((tn, emb2), lambda i: (i, 0)),
                   pl.BlockSpec((tn, gin), lambda i: (i, 0))),
        out_shape=(jax.ShapeDtypeStruct((n, emb2), F32),
                   jax.ShapeDtypeStruct((n, gin), F32)),
        compiler_params=_cparams(blocks),
    )(x, fp["w_eies"], fp["b_eies"], fp["w_de"], fp["b_de"])


def _pewe_call(fp, es, src, dst, non_image):
    nid = fp["non_image_dim"]
    emb = fp["embedding_dim"]
    w1t, b1t, w2t, b2t = fp["pewe"]
    ph = w1t.shape[0]
    e = src.shape[0]
    ep = ((e + EDGE_TILE - 1) // EDGE_TILE) * EDGE_TILE

    # TODO(synk): the es[src]/es[dst] row gather stays in JAX (XLA gather); fusing it into
    # the kernel needs a per-row manual-DMA gather (memory_space=pl.ANY + make_async_copy).
    es_t = es.T                                       # (EMB, N)
    es1 = jnp.take(es_t, src, axis=1)                 # (EMB, E)
    es2 = jnp.take(es_t, dst, axis=1)
    ni1 = non_image[:, :nid].T                        # (nid, E)
    ni2 = non_image[:, nid:].T

    def pad_e(a):
        return a if ep == e else jnp.pad(a, ((0, 0), (0, ep - e)))
    es1, es2, ni1, ni2 = pad_e(es1), pad_e(es2), pad_e(ni1), pad_e(ni2)

    blocks = ([((nid, EDGE_TILE), F32)] * 2 + [((emb, EDGE_TILE), F32)] * 2
              + [((ph, nid), F32), ((ph, 1), F32), ((ph, ph), F32), ((ph, 1), F32),
                 ((1, EDGE_TILE), F32)])
    ew = pl.pallas_call(
        pewe_kernel,
        grid=(ep // EDGE_TILE,),
        in_specs=[pl.BlockSpec((nid, EDGE_TILE), lambda t: (0, t)),
                  pl.BlockSpec((nid, EDGE_TILE), lambda t: (0, t)),
                  pl.BlockSpec((emb, EDGE_TILE), lambda t: (0, t)),
                  pl.BlockSpec((emb, EDGE_TILE), lambda t: (0, t)),
                  pl.BlockSpec((ph, nid), lambda t: (0, 0)),
                  pl.BlockSpec((ph, 1), lambda t: (0, 0)),
                  pl.BlockSpec((ph, ph), lambda t: (0, 0)),
                  pl.BlockSpec((ph, 1), lambda t: (0, 0))],
        out_specs=pl.BlockSpec((1, EDGE_TILE), lambda t: (0, t)),
        out_shape=jax.ShapeDtypeStruct((1, ep), F32),
        compiler_params=_cparams(blocks),
    )(ni1, ni2, es1, es2, w1t, b1t, w2t, b2t)
    return ew[0, :e]                                  # drop padded edges


def _cheb_layer(lhat_p, h, weights):
    # One ChebConv(K=3, sym, lambda_max=2, no bias) + ReLU, streamed over row tiles of
    # L_hat with the (small) full activation resident per call; two passes per layer
    # because the second hop needs all rows of Tx1.
    # TODO(synk): for very large N (or gcn_input_dim) the resident (N, C) activation
    # should additionally be streamed in K tiles with an accumulation grid axis.
    w0p, w1, w2p = weights
    n, c = h.shape
    hdim = w1.shape[1]
    tn = _row_tile(n)
    lhat_dt = GRAPH_MM_DTYPE

    hop_blocks = [((tn, n), lhat_dt), ((n, c), F32), ((tn, c), F32)]
    tx1 = pl.pallas_call(
        cheb_hop_kernel,
        grid=(n // tn,),
        in_specs=[pl.BlockSpec((tn, n), lambda i: (i, 0)),
                  pl.BlockSpec((n, c), lambda i: (0, 0))],
        out_specs=pl.BlockSpec((tn, c), lambda i: (i, 0)),
        out_shape=jax.ShapeDtypeStruct((n, c), F32),
        compiler_params=_cparams(hop_blocks),
    )(lhat_p, h)

    mix_blocks = [((tn, n), lhat_dt), ((n, c), F32), ((tn, c), F32), ((tn, c), F32),
                  ((c, hdim), F32), ((c, hdim), F32), ((c, hdim), F32), ((tn, hdim), F32)]
    h_next = pl.pallas_call(
        cheb_mix_kernel,
        grid=(n // tn,),
        in_specs=[pl.BlockSpec((tn, n), lambda i: (i, 0)),
                  pl.BlockSpec((n, c), lambda i: (0, 0)),
                  pl.BlockSpec((tn, c), lambda i: (i, 0)),
                  pl.BlockSpec((tn, c), lambda i: (i, 0)),
                  pl.BlockSpec((c, hdim), lambda i: (0, 0)),
                  pl.BlockSpec((c, hdim), lambda i: (0, 0)),
                  pl.BlockSpec((c, hdim), lambda i: (0, 0))],
        out_specs=pl.BlockSpec((tn, hdim), lambda i: (i, 0)),
        out_shape=jax.ShapeDtypeStruct((n, hdim), F32),
        compiler_params=_cparams(mix_blocks),
    )(lhat_p, tx1, tx1, h, w0p, w1, w2p)
    return h_next


def _heads_call(fp, ei, hs):
    n, emb = ei.shape
    num_layers = len(hs)
    hdim = hs[0].shape[1]
    lw1_list = fp["label_w1"]
    lb1, lw2, lb2 = fp["label_rest"]
    sw1, sb1, sw2, sb2 = fp["site_clf"]
    clf = lb1.shape[1]
    cpad = lw2.shape[1]
    spad = sw2.shape[1]
    tn = _row_tile(n)

    tile = lambda shape: pl.BlockSpec(shape, lambda i: (i, 0))
    full = lambda shape: pl.BlockSpec(shape, lambda i: (0, 0))

    in_specs = ([tile((tn, emb))]
                + [tile((tn, hdim)) for _ in range(num_layers)]
                + [full((hdim, clf)) for _ in range(num_layers)]
                + [full((1, clf)), full((clf, cpad)), full((1, cpad)),
                   full((emb, clf)), full((1, clf)), full((clf, spad)), full((1, spad))])
    blocks = ([((tn, emb), F32)] + [((tn, hdim), F32)] * num_layers
              + [((hdim, clf), F32)] * num_layers
              + [((1, clf), F32), ((clf, cpad), F32), ((1, cpad), F32),
                 ((emb, clf), F32), ((1, clf), F32), ((clf, spad), F32), ((1, spad), F32),
                 ((tn, cpad), F32), ((tn, spad), F32)])
    label_p, site_p = pl.pallas_call(
        make_heads_kernel(num_layers),
        grid=(n // tn,),
        in_specs=in_specs,
        out_specs=(tile((tn, cpad)), tile((tn, spad))),
        out_shape=(jax.ShapeDtypeStruct((n, cpad), F32),
                   jax.ShapeDtypeStruct((n, spad), F32)),
        compiler_params=_cparams(blocks),
    )(ei, *hs, *lw1_list, lb1, lw2, lb2, sw1, sb1, sw2, sb2)
    return label_p[:, :fp["num_classes"]], site_p[:, :fp["num_sites"]]


# ---------------------------- JAX glue ----------------------------

def build_lhat(edge_index, edge_weight, num_nodes):
    # PyG ChebConv scaled Laplacian (sym norm, lambda_max=2):
    #   out[i] = sum_j ( -d[j] * A[j, i] * d[i] ) * x[j],  d = deg^{-1/2} over sources.
    # TODO(synk): scatter-add adjacency build has no clean Pallas equivalent; done in JAX.
    src, dst = edge_index[0], edge_index[1]
    a = jnp.zeros((num_nodes, num_nodes), F32).at[src, dst].add(edge_weight)
    deg = a.sum(axis=1)
    d = jnp.where(deg > 0, jax.lax.rsqrt(deg), 0.0)
    return -(d[:, None] * a * d[None, :]).T


def kaiming(key, fan_in, fan_out):
    # PyTorch kaiming_normal_ (fan_in mode, gain=sqrt(2)); stored transposed as (in, out).
    return jax.random.normal(key, (fan_in, fan_out), F32) * jnp.sqrt(2.0 / fan_in)


def bn_params(key, features):
    k1, k2, k3, k4 = jax.random.split(key, 4)
    return dict(gamma=jax.random.uniform(k1, (1, features), F32, 0.5, 1.5),
                beta=0.1 * jax.random.normal(k2, (1, features), F32),
                rm=0.1 * jax.random.normal(k3, (1, features), F32),
                rv=jax.random.uniform(k4, (1, features), F32, 0.5, 1.5))


def make_params(key, input_dim, embedding_dim, gcn_input_dim, gcn_hidden, gcn_layers,
                num_classes, non_image_dim, pewe_hidden=128, clf_hidden=256):
    keys = iter(jax.random.split(key, 64))
    b = lambda f: 0.1 * jax.random.normal(next(keys), (1, f), F32)
    p = {}
    p["EI_w"], p["EI_b"] = kaiming(next(keys), input_dim, embedding_dim), b(embedding_dim)
    p["ES_w"], p["ES_b"] = kaiming(next(keys), input_dim, embedding_dim), b(embedding_dim)
    p["DE_w"], p["DE_b"] = (kaiming(next(keys), 2 * embedding_dim, gcn_input_dim),
                            b(gcn_input_dim))
    p["gconv"] = []
    for i in range(gcn_layers):
        in_c = gcn_input_dim if i == 0 else gcn_hidden
        p["gconv"].append(tuple(kaiming(next(keys), in_c, gcn_hidden) for _ in range(3)))
    cls_in = gcn_hidden * gcn_layers
    p["label_clf"] = dict(w1=kaiming(next(keys), cls_in, clf_hidden), b1=b(clf_hidden),
                          w2=kaiming(next(keys), clf_hidden, num_classes),
                          b2=b(num_classes), **bn_params(next(keys), clf_hidden))
    p["site_clf"] = dict(w1=kaiming(next(keys), embedding_dim, clf_hidden), b1=b(clf_hidden),
                         w2=kaiming(next(keys), clf_hidden, 20), b2=b(20),
                         **bn_params(next(keys), clf_hidden))
    p["pewe"] = dict(w1=kaiming(next(keys), non_image_dim, pewe_hidden), b1=b(pewe_hidden),
                     w2=kaiming(next(keys), pewe_hidden, pewe_hidden), b2=b(pewe_hidden),
                     **bn_params(next(keys), pewe_hidden))
    return p


def _fold_bn_into_second_linear(head):
    # eval-mode BN (running stats) is a per-feature affine -> fold into the next Linear.
    scale = head["gamma"] * jax.lax.rsqrt(head["rv"] + BN_EPS)     # (1, hid)
    shift = head["beta"] - head["rm"] * scale                      # (1, hid)
    w2f = scale.reshape(-1, 1) * head["w2"]                        # (hid, out)
    b2f = head["b2"] + shift @ head["w2"]                          # (1, out)
    return head["w1"], head["b1"], w2f, b2f


def prepare_inference_params(p):
    """Eval-mode constant folding, weight restructuring and padding (once, in JAX)."""
    fp = {}
    fp["embedding_dim"] = p["EI_w"].shape[1]
    fp["non_image_dim"] = p["pewe"]["w1"].shape[0]
    fp["w_eies"] = jnp.concatenate([p["EI_w"], p["ES_w"]], axis=1)   # (in, 2*EMB)
    fp["b_eies"] = jnp.concatenate([p["EI_b"], p["ES_b"]], axis=1)   # (1, 2*EMB)
    fp["w_de"], fp["b_de"] = p["DE_w"], p["DE_b"]

    # Chebyshev recurrence constants folded into the weights:
    #   Tx0@W0 + Tx1@W1 + (2*L@Tx1 - Tx0)@W2 == Tx0@(W0-W2) + Tx1@W1 + (L@Tx1)@(2*W2)
    fp["gconv"] = [(w0 - w2, w1, 2.0 * w2) for (w0, w1, w2) in p["gconv"]]
    # TODO(synk): gcn_hidden is left unpadded (padding to 128 lanes would multiply the
    # N^2-scaled propagation FLOPs); lane-dense padding is applied to the head outputs.

    hdim = p["gconv"][0][0].shape[1]
    nl = len(p["gconv"])
    lw1, lb1, lw2, lb2 = _fold_bn_into_second_linear(p["label_clf"])
    # per-layer slices of the label head's first linear (jk concat never materialized)
    fp["label_w1"] = [lw1[l * hdim:(l + 1) * hdim] for l in range(nl)]
    fp["num_classes"] = lw2.shape[1]
    fp["label_rest"] = (lb1, _pad_cols(lw2, OUT_PAD), _pad_cols(lb2, OUT_PAD))

    sw1, sb1, sw2, sb2 = _fold_bn_into_second_linear(p["site_clf"])
    fp["num_sites"] = sw2.shape[1]
    fp["site_clf"] = (sw1, sb1, _pad_cols(sw2, OUT_PAD), _pad_cols(sb2, OUT_PAD))

    w1, b1, w2f, b2f = _fold_bn_into_second_linear(p["pewe"])
    # PEWE kernel works column-major (features on sublanes, edges on lanes)
    fp["pewe"] = (w1.T, b1.T, w2f.T, b2f.T)
    return fp


def dpgc_forward(fp, image_features, edge_index, non_image_features):
    # eval mode: edge dropout & feature dropout are identity.
    n = image_features.shape[0]
    emb = fp["embedding_dim"]

    # (1) fused EI / ES / DE(reconstruct); single wide lane-dense eies store
    eies, recon = _embed_call(fp, image_features)
    ei = eies[:, :emb]
    es = eies[:, emb:]

    # (2) PEWE edge weights, tiled over (padded) edges
    src, dst = edge_index[0], edge_index[1]
    edge_weight = _pewe_call(fp, es, src, dst, non_image_features)

    # (3) scaled Laplacian, pre-cast ONCE to the propagation dtype (halves its DMA)
    lhat_p = build_lhat(edge_index, edge_weight, n).astype(GRAPH_MM_DTYPE)

    # (4) ChebConv stack (L_hat streamed in row tiles, megacore-parallel grid)
    h = ei
    hs = []
    for weights in fp["gconv"]:
        h = _cheb_layer(lhat_p, h, weights)
        hs.append(h)

    # (5) both classifier heads in one row-tiled kernel
    label_logits, site_logits = _heads_call(fp, ei, hs)
    return label_logits, site_logits, es, recon


# ---------------------------- pure-JAX reference ----------------------------

def reference_forward(p, image_features, edge_index, non_image_features):
    hp = lambda a, b: jnp.dot(a, b, precision="highest")
    nid = p["pewe"]["w1"].shape[0]
    n = image_features.shape[0]

    def bn(x, q):
        return (x - q["rm"]) * jax.lax.rsqrt(q["rv"] + BN_EPS) * q["gamma"] + q["beta"]

    ei = hp(image_features, p["EI_w"]) + p["EI_b"]
    es = hp(image_features, p["ES_w"]) + p["ES_b"]
    recon = hp(jnp.concatenate([ei, es], axis=1), p["DE_w"]) + p["DE_b"]

    src, dst = edge_index[0], edge_index[1]
    q = p["pewe"]

    def parser(z):
        h = jnp.maximum(hp(z, q["w1"]) + q["b1"], 0.0)
        return hp(bn(h, q), q["w2"]) + q["b2"]

    h1 = jnp.concatenate([parser(non_image_features[:, :nid]), es[src]], axis=1)
    h2 = jnp.concatenate([parser(non_image_features[:, nid:]), es[dst]], axis=1)
    n1 = jnp.maximum(jnp.sqrt(jnp.sum(h1 * h1, axis=1)), COS_EPS)
    n2 = jnp.maximum(jnp.sqrt(jnp.sum(h2 * h2, axis=1)), COS_EPS)
    edge_weight = (jnp.sum(h1 * h2, axis=1) / (n1 * n2) + 1.0) * 0.5

    lhat = build_lhat(edge_index, edge_weight, n)
    h = ei
    hs = []
    for (w0, w1c, w2c) in p["gconv"]:
        tx1 = hp(lhat, h)
        tx2 = 2.0 * hp(lhat, tx1) - h
        h = jnp.maximum(hp(h, w0) + hp(tx1, w1c) + hp(tx2, w2c), 0.0)
        hs.append(h)
    jk = jnp.concatenate(hs, axis=1)

    def head(z, q):
        t = jnp.maximum(hp(z, q["w1"]) + q["b1"], 0.0)
        return hp(bn(t, q), q["w2"]) + q["b2"]

    return head(jk, p["label_clf"]), head(ei, p["site_clf"]), es, recon


# ---------------------------- demo ----------------------------

if __name__ == "__main__":
    # Small, self-consistent shapes; gcn_input_dim must equal embedding_dim for the
    # original forward to typecheck (gconv[0] consumes `ei`).
    N = 256
    INPUT_DIM = 64
    EMB = GCN_IN = 32
    GCN_HID = 16
    GCN_LAYERS = 4
    NUM_CLASSES = 2
    NON_IMAGE_DIM = 3

    key = jax.random.PRNGKey(0)
    k_param, k_img, k_ni = jax.random.split(key, 3)

    params = make_params(k_param, INPUT_DIM, EMB, GCN_IN, GCN_HID, GCN_LAYERS,
                         NUM_CLASSES, NON_IMAGE_DIM)
    fparams = prepare_inference_params(params)

    image_features = jax.random.normal(k_img, (N, INPUT_DIM), F32)

    # deterministic ring graph (both directions) + a few self loops so the edge count is
    # not a multiple of the edge tile (exercises the padding path).
    idx = jnp.arange(N, dtype=jnp.int32)
    nxt = (idx + 1) % N
    loops = jnp.arange(5, dtype=jnp.int32)
    edge_index = jnp.concatenate(
        [jnp.stack([idx, nxt], axis=0), jnp.stack([nxt, idx], axis=0),
         jnp.stack([loops, loops], axis=0)], axis=1)                    # (2, 2N+5)
    E = edge_index.shape[1]
    non_image_features = jax.random.normal(k_ni, (E, 2 * NON_IMAGE_DIM), F32)

    outs = dpgc_forward(fparams, image_features, edge_index, non_image_features)
    outs = jax.block_until_ready(outs)
    label_logits, site_logits, es, recon = outs

    assert label_logits.shape == (N, NUM_CLASSES)
    assert site_logits.shape == (N, 20)
    assert es.shape == (N, EMB)
    assert recon.shape == (N, GCN_IN)
    assert all(bool(jnp.all(jnp.isfinite(o))) for o in outs)

    # pure-JAX f32 reference (eval-mode semantics of the PyTorch module)
    ref_label, ref_site, ref_es, ref_recon = reference_forward(
        params, image_features, edge_index, non_image_features)

    def close(a, b, tol):
        return float(jnp.max(jnp.abs(a - b))) <= tol * (float(jnp.max(jnp.abs(b))) + 1.0)

    assert close(es, ref_es, 1e-2)
    assert close(recon, ref_recon, 1e-2)
    assert close(site_logits, ref_site, 1e-2)      # f32 path
    assert close(label_logits, ref_label, 5e-2)    # bf16 graph-propagation path
    print("KERNEL_OK")
</pallas_src>

<mosaic_0001>
module attributes {stable_mosaic.version = 11 : i64} {
  func.func @embed_kernel(%arg0: i32, %arg1: memref<128x64xf32, #tpu.memory_space<vmem>>, %arg2: memref<64x64xf32, #tpu.memory_space<vmem>>, %arg3: memref<1x64xf32, #tpu.memory_space<vmem>>, %arg4: memref<64x32xf32, #tpu.memory_space<vmem>>, %arg5: memref<1x32xf32, #tpu.memory_space<vmem>>, %arg6: memref<128x64xf32, #tpu.memory_space<vmem>>, %arg7: memref<128x32xf32, #tpu.memory_space<vmem>>) attributes {dimension_semantics = [#tpu.dimension_semantics<parallel>], iteration_bounds = array<i64: 2>, scalar_prefetch = 0 : i64, scratch_operands = 0 : i64, tpu.core_type = #tpu.core_type<tc>, window_params = [{transform_indices = @transform_0, window_bounds = array<i64: 128, 64>}, {pipeline_mode = #tpu.pipeline_mode<synchronous>, transform_indices = @transform_1, window_bounds = array<i64: 64, 64>}, {pipeline_mode = #tpu.pipeline_mode<synchronous>, transform_indices = @transform_2, window_bounds = array<i64: 1, 64>}, {pipeline_mode = #tpu.pipeline_mode<synchronous>, transform_indices = @transform_3, window_bounds = array<i64: 64, 32>}, {pipeline_mode = #tpu.pipeline_mode<synchronous>, transform_indices = @transform_4, window_bounds = array<i64: 1, 32>}, {transform_indices = @transform_5, window_bounds = array<i64: 128, 64>}, {transform_indices = @transform_6, window_bounds = array<i64: 128, 32>}]} {
    %c0 = arith.constant 0 : index
    %c0_0 = arith.constant 0 : index
    %0 = vector.load %arg1[%c0, %c0_0] : memref<128x64xf32, #tpu.memory_space<vmem>>, vector<128x64xf32>
    %c0_1 = arith.constant 0 : index
    %c0_2 = arith.constant 0 : index
    %1 = vector.load %arg2[%c0_1, %c0_2] : memref<64x64xf32, #tpu.memory_space<vmem>>, vector<64x64xf32>
    %cst = arith.constant dense<0.000000e+00> : vector<128x64xf32>
    %2 = tpu.matmul %0, %1, %cst {dimension_numbers = #tpu.dot_dimension_numbers<[1], [0], [0], [1], [0, 0, 1, 1], [], []>} : vector<128x64xf32>, vector<64x64xf32>, vector<128x64xf32> -> vector<128x64xf32>
    %c0_3 = arith.constant 0 : index
    %c0_4 = arith.constant 0 : index
    %3 = vector.load %arg3[%c0_3, %c0_4] : memref<1x64xf32, #tpu.memory_space<vmem>>, vector<1x64xf32>
    %4 = vector.broadcast %3 : vector<1x64xf32> to vector<128x64xf32>
    %5 = arith.addf %2, %4 : vector<128x64xf32>
    %c0_5 = arith.constant 0 : index
    %c0_6 = arith.constant 0 : index
    %6 = vector.load %arg6[%c0_5, %c0_6] : memref<128x64xf32, #tpu.memory_space<vmem>>, vector<128x64xf32>
    tpu.vector_store %arg6[%c0_5, %c0_6], %5 {strides = array<i32>} : memref<128x64xf32, #tpu.memory_space<vmem>>, vector<128x64xf32>,
    %c0_7 = arith.constant 0 : index
    %c0_8 = arith.constant 0 : index
    %7 = vector.load %arg4[%c0_7, %c0_8] : memref<64x32xf32, #tpu.memory_space<vmem>>, vector<64x32xf32>
    %cst_9 = arith.constant dense<0.000000e+00> : vector<128x32xf32>
    %8 = tpu.matmul %5, %7, %cst_9 {dimension_numbers = #tpu.dot_dimension_numbers<[1], [0], [0], [1], [0, 0, 1, 1], [], []>} : vector<128x64xf32>, vector<64x32xf32>, vector<128x32xf32> -> vector<128x32xf32>
    %c0_10 = arith.constant 0 : index
    %c0_11 = arith.constant 0 : index
    %9 = vector.load %arg5[%c0_10, %c0_11] : memref<1x32xf32, #tpu.memory_space<vmem>>, vector<1x32xf32>
    %10 = vector.broadcast %9 : vector<1x32xf32> to vector<128x32xf32>
    %11 = arith.addf %8, %10 : vector<128x32xf32>
    %c0_12 = arith.constant 0 : index
    %c0_13 = arith.constant 0 : index
    %12 = vector.load %arg7[%c0_12, %c0_13] : memref<128x32xf32, #tpu.memory_space<vmem>>, vector<128x32xf32>
    tpu.vector_store %arg7[%c0_12, %c0_13], %11 {strides = array<i32>} : memref<128x32xf32, #tpu.memory_space<vmem>>, vector<128x32xf32>,
    return
  }
  func.func @transform_0(%arg0: i32) -> (i32, i32) {
    %c0_i32 = arith.constant 0 : i32
    %c0_i32_0 = arith.constant 0 : i32
    return %arg0, %c0_i32 : i32, i32
  }
  func.func @transform_1(%arg0: i32) -> (i32, i32) {
    %c0_i32 = arith.constant 0 : i32
    %c0_i32_0 = arith.constant 0 : i32
    %c0_i32_1 = arith.constant 0 : i32
    return %c0_i32, %c0_i32_0 : i32, i32
  }
  func.func @transform_2(%arg0: i32) -> (i32, i32) {
    %c0_i32 = arith.constant 0 : i32
    %c0_i32_0 = arith.constant 0 : i32
    %c0_i32_1 = arith.constant 0 : i32
    return %c0_i32, %c0_i32_0 : i32, i32
  }
  func.func @transform_3(%arg0: i32) -> (i32, i32) {
    %c0_i32 = arith.constant 0 : i32
    %c0_i32_0 = arith.constant 0 : i32
    %c0_i32_1 = arith.constant 0 : i32
    return %c0_i32, %c0_i32_0 : i32, i32
  }
  func.func @transform_4(%arg0: i32) -> (i32, i32) {
    %c0_i32 = arith.constant 0 : i32
    %c0_i32_0 = arith.constant 0 : i32
    %c0_i32_1 = arith.constant 0 : i32
    return %c0_i32, %c0_i32_0 : i32, i32
  }
  func.func @transform_5(%arg0: i32) -> (i32, i32) {
    %c0_i32 = arith.constant 0 : i32
    %c0_i32_0 = arith.constant 0 : i32
    return %arg0, %c0_i32 : i32, i32
  }
  func.func @transform_6(%arg0: i32) -> (i32, i32) {
    %c0_i32 = arith.constant 0 : i32
    %c0_i32_0 = arith.constant 0 : i32
    return %arg0, %c0_i32 : i32, i32
  }
}

</mosaic_0001>

<llo_original>
// kernel: tpu_custom_call.1
$region0: #{tpu_custom_call.1}
  #allocation0 [shape = 'u32[]', space=smem, size = 0x4, offset = 0x4, fixed_abs, tag = 'smem constant byte address 0x4 - core index']
  #allocation1 [shape = 'u32[144,128]{1,0:T(1,128)}', space=vmem, size = 0x12000, scoped, tag = 'internal scratch']
  %s0 = inlined_call_operand.vmem [shape: f32[256,64], index: 0, kind: input, shape index: {}]
  %s1 = inlined_call_operand.vmem [shape: f32[64,64], index: 1, kind: input, shape index: {}]
  %s2 = inlined_call_operand.vmem [shape: f32[1,64], index: 2, kind: input, shape index: {}]
  %s3 = inlined_call_operand.vmem [shape: f32[64,32], index: 3, kind: input, shape index: {}]
  %s4 = inlined_call_operand.vmem [shape: f32[1,32], index: 4, kind: input, shape index: {}]
  %s5 = inlined_call_operand.vmem [shape: f32[256,64], index: 5, kind: output, shape index: {0}]
  %s6 = inlined_call_operand.vmem [shape: f32[256,32], index: 6, kind: output, shape index: {1}]
  %7 = xla_tuple %s5, %s6
  %s8 = sld [smem:[#allocation0]]
  $region61: #{tpu_custom_call.1} parent=0
    _
  %s10 = ssub.s32 1, %s8
  %s11 = scalar_select 0, %s10, %s8
  loop: start=0, step=1, limit=4
  $region2: #{tpu_custom_call.1} parent=0 // loop_pre_header
    _
  $region3: #{tpu_custom_call.1} parent=0 // loop_header
    %s13 = sphi 0, %s17
    %p14 = scmp.ge.s32.totalorder %s13, 4
    %s23 = sphi 0, %s25
    %s26 = sphi 0, %s23
    %s27 = sphi 0, %s26
    %s43 = sphi 0, %s27
    %s47 = sphi 0, %s47
    %s49 = sphi 0, %s47
    %s50 = sphi 0, %s49
    %s64 = sphi 0, %s50
    %s68 = sphi 0, %s68
    %s70 = sphi 0, %s68
    %s71 = sphi 0, %s70
    %s85 = sphi 0, %s71
    %s89 = sphi 0, %s89
    %s91 = sphi 0, %s89
    %s92 = sphi 0, %s91
    %s106 = sphi 0, %s92
    %s110 = sphi 0, %s110
    %s112 = sphi 0, %s110
    %s113 = sphi 0, %s112
    %s127 = sphi 0, %s113
    %s133 = sphi 0, %s135
    %s136 = sphi 0, %s133
    %s137 = sphi 0, %s136
    %s153 = sphi 0, %s137
    %s159 = sphi 0, %s161
    %s162 = sphi 0, %s159
    %s163 = sphi 0, %s162
    %s179 = sphi 0, %s163
  $region4: #{tpu_custom_call.1} parent=0 // loop_header_branch
    %16 = sbr.rel (%p14) target = $region8
  $region5: #{tpu_custom_call.1} parent=0 // loop_body
    %s18 = ssub.s32 %s13, 1
    %s19 = ssub.s32 %s13, 2
    %s20 = sadd.s32 %s13, 1
    %s21 = ssub.s32 %s13, %s20
    %p22 = scmp.eq.s32.totalorder %s21, 0
    %s24 = sadd.s32 %s23, 1
    %s25 = scalar_select %p22, %s23, %s24
    %p28 = pneg %p22
    %p29 = scmp.eq.s32.totalorder %s13, 1
    %p30 = por %p28, %p29
    %p31 = scmp.ne.s32.totalorder %s23, %s26
    %p32 = scmp.eq.s32.totalorder %s13, 0
    %p33 = por %p31, %p32
    %p34 = scmp.ne.s32.totalorder %s23, %s26
    %p35 = scmp.eq.s32.totalorder %s18, 1
    %p36 = por %p34, %p35
    %p37 = scmp.ne.s32.totalorder %s26, %s27
    %p38 = scmp.eq.s32.totalorder %s18, 0
    %p39 = por %p37, %p38
    %p40 = scmp.ne.s32.totalorder %s26, %s27
    %p41 = scmp.eq.s32.totalorder %s19, 1
    %p42 = por %p40, %p41
    %p44 = scmp.ne.s32.totalorder %s27, %s43
    %p45 = scmp.eq.s32.totalorder %s19, 0
    %p46 = por %p44, %p45
    %s48 = sadd.s32 %s47, 1
    %p51 = scmp.eq.s32.totalorder %s13, 1
    %p52 = scmp.ne.s32.totalorder %s47, %s49
    %p53 = scmp.eq.s32.totalorder %s13, 0
    %p54 = por %p52, %p53
    %p55 = scmp.ne.s32.totalorder %s47, %s49
    %p56 = scmp.eq.s32.totalorder %s18, 1
    %p57 = por %p55, %p56
    %p58 = scmp.ne.s32.totalorder %s49, %s50
    %p59 = scmp.eq.s32.totalorder %s18, 0
    %p60 = por %p58, %p59
    %p61 = scmp.ne.s32.totalorder %s49, %s50
    %p62 = scmp.eq.s32.totalorder %s19, 1
    %p63 = por %p61, %p62
    %p65 = scmp.ne.s32.totalorder %s50, %s64
    %p66 = scmp.eq.s32.totalorder %s19, 0
    %p67 = por %p65, %p66
    %s69 = sadd.s32 %s68, 1
    %p72 = scmp.eq.s32.totalorder %s13, 1
    %p73 = scmp.ne.s32.totalorder %s68, %s70
    %p74 = scmp.eq.s32.totalorder %s13, 0
    %p75 = por %p73, %p74
    %p76 = scmp.ne.s32.totalorder %s68, %s70
    %p77 = scmp.eq.s32.totalorder %s18, 1
    %p78 = por %p76, %p77
    %p79 = scmp.ne.s32.totalorder %s70, %s71
    %p80 = scmp.eq.s32.totalorder %s18, 0
    %p81 = por %p79, %p80
    %p82 = scmp.ne.s32.totalorder %s70, %s71
    %p83 = scmp.eq.s32.totalorder %s19, 1
    %p84 = por %p82, %p83
    %p86 = scmp.ne.s32.totalorder %s71, %s85
    %p87 = scmp.eq.s32.totalorder %s19, 0
    %p88 = por %p86, %p87
    %s90 = sadd.s32 %s89, 1
    %p93 = scmp.eq.s32.totalorder %s13, 1
    %p94 = scmp.ne.s32.totalorder %s89, %s91
    %p95 = scmp.eq.s32.totalorder %s13, 0
    %p96 = por %p94, %p95
    %p97 = scmp.ne.s32.totalorder %s89, %s91
    %p98 = scmp.eq.s32.totalorder %s18, 1
    %p99 = por %p97, %p98
    %p100 = scmp.ne.s32.totalorder %s91, %s92
    %p101 = scmp.eq.s32.totalorder %s18, 0
    %p102 = por %p100, %p101
    %p103 = scmp.ne.s32.totalorder %s91, %s92
    %p104 = scmp.eq.s32.totalorder %s19, 1
    %p105 = por %p103, %p104
    %p107 = scmp.ne.s32.totalorder %s92, %s106
    %p108 = scmp.eq.s32.totalorder %s19, 0
    %p109 = por %p107, %p108
    %s111 = sadd.s32 %s110, 1
    %p114 = scmp.eq.s32.totalorder %s13, 1
    %p115 = scmp.ne.s32.totalorder %s110, %s112
    %p116 = scmp.eq.s32.totalorder %s13, 0
    %p117 = por %p115, %p116
    %p118 = scmp.ne.s32.totalorder %s110, %s112
    %p119 = scmp.eq.s32.totalorder %s18, 1
    %p120 = por %p118, %p119
    %p121 = scmp.ne.s32.totalorder %s112, %s113
    %p122 = scmp.eq.s32.totalorder %s18, 0
    %p123 = por %p121, %p122
    %p124 = scmp.ne.s32.totalorder %s112, %s113
    %p125 = scmp.eq.s32.totalorder %s19, 1
    %p126 = por %p124, %p125
    %p128 = scmp.ne.s32.totalorder %s113, %s127
    %p129 = scmp.eq.s32.totalorder %s19, 0
    %p130 = por %p128, %p129
    %s131 = ssub.s32 %s13, %s20
    %p132 = scmp.eq.s32.totalorder %s131, 0
    %s134 = sadd.s32 %s133, 1
    %s135 = scalar_select %p132, %s133, %s134
    %p138 = pneg %p132
    %p139 = scmp.eq.s32.totalorder %s13, 1
    %p140 = por %p138, %p139
    %p141 = scmp.ne.s32.totalorder %s133, %s136
    %p142 = scmp.eq.s32.totalorder %s13, 0
    %p143 = por %p141, %p142
    %p144 = scmp.ne.s32.totalorder %s133, %s136
    %p145 = scmp.eq.s32.totalorder %s18, 1
    %p146 = por %p144, %p145
    %p147 = scmp.ne.s32.totalorder %s136, %s137
    %p148 = scmp.eq.s32.totalorder %s18, 0
    %p149 = por %p147, %p148
    %p150 = scmp.ne.s32.totalorder %s136, %s137
    %p151 = scmp.eq.s32.totalorder %s19, 1
    %p152 = por %p150, %p151
    %p154 = scmp.ne.s32.totalorder %s137, %s153
    %p155 = scmp.eq.s32.totalorder %s19, 0
    %p156 = por %p154, %p155
    %s157 = ssub.s32 %s13, %s20
    %p158 = scmp.eq.s32.totalorder %s157, 0
    %s160 = sadd.s32 %s159, 1
    %s161 = scalar_select %p158, %s159, %s160
    %p164 = pneg %p158
    %p165 = scmp.eq.s32.totalorder %s13, 1
    %p166 = por %p164, %p165
    %p167 = scmp.ne.s32.totalorder %s159, %s162
    %p168 = scmp.eq.s32.totalorder %s13, 0
    %p169 = por %p167, %p168
    %p170 = scmp.ne.s32.totalorder %s159, %s162
    %p171 = scmp.eq.s32.totalorder %s18, 1
    %p172 = por %p170, %p171
    %p173 = scmp.ne.s32.totalorder %s162, %s163
    %p174 = scmp.eq.s32.totalorder %s18, 0
    %p175 = por %p173, %p174
    %p176 = scmp.ne.s32.totalorder %s162, %s163
    %p177 = scmp.eq.s32.totalorder %s19, 1
    %p178 = por %p176, %p177
    %p180 = scmp.ne.s32.totalorder %s163, %s179
    %p181 = scmp.eq.s32.totalorder %s19, 0
    %p182 = por %p180, %p181
    %p183 = scmp.le.s32.totalorder 1, %s13
    %p184 = scmp.lt.s32.totalorder %s13, 3
    %p185 = pnand %p183, %p184
    %p186 = pneg %p185
    // Predicated region
    $region9: #{tpu_custom_call.1} parent=5 // pred_check
      _
    $region10: #{tpu_custom_call.1} parent=5 // pred_check_branch
      %188 = sbr.rel (%p185) target = $region12
    $region11: #{tpu_custom_call.1} parent=5 // pred_region
      %s189 = ssub.s32 %s13, 1
      // Predicated region
      $region13: #{tpu_custom_call.1} parent=11 // pred_check
        %p190 = pneg %p60
      $region14: #{tpu_custom_call.1} parent=11 // pred_check_branch
        %192 = sbr.rel (%p190) target = $region16
      $region15: #{tpu_custom_call.1} parent=11 // pred_region
        _
      $region16: #{tpu_custom_call.1} parent=11 // pred_fallthru
        _
      // Predicated region
      $region17: #{tpu_custom_call.1} parent=11 // pred_check
        %p193 = pneg %p81
      $region18: #{tpu_custom_call.1} parent=11 // pred_check_branch
        %195 = sbr.rel (%p193) target = $region20
      $region19: #{tpu_custom_call.1} parent=11 // pred_region
        _
      $region20: #{tpu_custom_call.1} parent=11 // pred_fallthru
        _
      // Predicated region
      $region21: #{tpu_custom_call.1} parent=11 // pred_check
        %p196 = pneg %p102
      $region22: #{tpu_custom_call.1} parent=11 // pred_check_branch
        %198 = sbr.rel (%p196) target = $region24
      $region23: #{tpu_custom_call.1} parent=11 // pred_region
        _
      $region24: #{tpu_custom_call.1} parent=11 // pred_fallthru
        _
      // Predicated region
      $region25: #{tpu_custom_call.1} parent=11 // pred_check
        %p199 = pneg %p123
      $region26: #{tpu_custom_call.1} parent=11 // pred_check_branch
        %201 = sbr.rel (%p199) target = $region28
      $region27: #{tpu_custom_call.1} parent=11 // pred_region
        _
      $region28: #{tpu_custom_call.1} parent=11 // pred_fallthru
        _
    $region12: #{tpu_custom_call.1} parent=5 // pred_fallthru
      _
    %p202 = scmp.lt.s32.totalorder %s13, 2
    // Predicated region
    $region29: #{tpu_custom_call.1} parent=5 // pred_check
      %p203 = pneg %p202
    $region30: #{tpu_custom_call.1} parent=5 // pred_check_branch
      %205 = sbr.rel (%p203) target = $region32
    $region31: #{tpu_custom_call.1} parent=5 // pred_region
      // Predicated region
      $region33: #{tpu_custom_call.1} parent=31 // pred_check
        %p206 = pneg %p33
      $region34: #{tpu_custom_call.1} parent=31 // pred_check_branch
        %208 = sbr.rel (%p206) target = $region36
      $region35: #{tpu_custom_call.1} parent=31 // pred_region
        %s209 = smul.u32 16, %s13
        %p210 = scmp.lt.s32.totalorder %s209, 31
        %s211 = scalar_select %p210, %s209, 31
        %s212 = smul.addr %s211, 8
        %s213 = scalar_lea.vmem %s0, %s212
        %s214 = smul.u32 16, %s13
      $region36: #{tpu_custom_call.1} parent=31 // pred_fallthru
        _
    $region32: #{tpu_custom_call.1} parent=5 // pred_fallthru
      _
    %p215 = scmp.le.s32.totalorder 1, %s13
    %p216 = scmp.lt.s32.totalorder %s13, 3
    %p217 = pnand %p215, %p216
    %p218 = pneg %p217
    // Predicated region
    $region37: #{tpu_custom_call.1} parent=5 // pred_check
      _
    $region38: #{tpu_custom_call.1} parent=5 // pred_check_branch
      %220 = sbr.rel (%p217) target = $region40
    $region39: #{tpu_custom_call.1} parent=5 // pred_region
      %s221 = ssub.s32 %s13, 1
      %s222 = smul.u32 16, %s18
      %p223 = scmp.lt.s32.totalorder %s222, 31
      %s224 = scalar_select %p223, %s222, 31
      %s225 = smul.addr %s224, 8
      %s226 = scalar_lea.vmem %s0, %s225
      %p227 = pneg %p39
      %p228 = pneg %p36
      %p229 = pneg %p60
      %p230 = pneg %p57
      %p231 = pneg %p81
      %p232 = pneg %p78
      %p233 = pneg %p102
      %p234 = pneg %p99
      %p235 = pneg %p123
      %p236 = pneg %p120
      %p237 = pneg %p149
      %p238 = pneg %p146
      %s239 = smul.u32 16, %s18
      %p240 = scmp.lt.s32.totalorder %s239, 31
      %s241 = scalar_select %p240, %s239, 31
      %s242 = smul.addr %s241, 8
      %s243 = scalar_lea.vmem %s5, %s242
      %p244 = pneg %p175
      %p245 = pneg %p172
      %s246 = smul.u32 16, %s18
      %p247 = scmp.lt.s32.totalorder %s246, 31
      %s248 = scalar_select %p247, %s246, 31
      %s249 = smul.addr %s248, 8
      %s250 = scalar_lea.vmem %s6, %s249
      %s251 = smul.u32 16, %s18
      %p252 = scmp.lt.s32.totalorder %s251, 31
      %s253 = scalar_select %p252, %s251, 31
      %s254 = smul.addr %s253, 8
      %s255 = scalar_lea.vmem %s0, %s254
      %s256 = smul.u32 16, %s18
      %s257 = smul.u32 16, %s18
      %p258 = scmp.lt.s32.totalorder %s257, 31
      %s259 = scalar_select %p258, %s257, 31
      %s260 = smul.addr %s259, 8
      %s261 = scalar_lea.vmem %s5, %s260
      %s262 = smul.u32 16, %s18
      %s263 = smul.u32 16, %s18
      %p264 = scmp.lt.s32.totalorder %s263, 31
      %s265 = scalar_select %p264, %s263, 31
      %s266 = smul.addr %s265, 8
      %s267 = scalar_lea.vmem %s6, %s266
      %s268 = smul.u32 16, %s18
      %v269 = vld [vmem:[%s255] sm:$0xff]
      %v270 = vld [vmem:[%s255 + $0x8] sm:$0xff]
      %v271 = vld [vmem:[%s255 + $0x10] sm:$0xff]
      %v272 = vld [vmem:[%s255 + $0x18] sm:$0xff]
      %v273 = vld [vmem:[%s255 + $0x20] sm:$0xff]
      %v274 = vld [vmem:[%s255 + $0x28] sm:$0xff]
      %v275 = vld [vmem:[%s255 + $0x30] sm:$0xff]
      %v276 = vld [vmem:[%s255 + $0x38] sm:$0xff]
      %v277 = vld [vmem:[%s255 + $0x40] sm:$0xff]
      %v278 = vld [vmem:[%s255 + $0x48] sm:$0xff]
      %v279 = vld [vmem:[%s255 + $0x50] sm:$0xff]
      %v280 = vld [vmem:[%s255 + $0x58] sm:$0xff]
      %v281 = vld [vmem:[%s255 + $0x60] sm:$0xff]
      %v282 = vld [vmem:[%s255 + $0x68] sm:$0xff]
      %v283 = vld [vmem:[%s255 + $0x70] sm:$0xff]
      %v284 = vld [vmem:[%s255 + $0x78] sm:$0xff]
      %v285 = vld [vmem:[%s1] sm:$0xff]
      %v286 = vld [vmem:[%s1 + $0x8] sm:$0xff]
      %v287 = vld [vmem:[%s1 + $0x10] sm:$0xff]
      %v288 = vld [vmem:[%s1 + $0x18] sm:$0xff]
      %v289 = vld [vmem:[%s1 + $0x20] sm:$0xff]
      %v290 = vld [vmem:[%s1 + $0x28] sm:$0xff]
      %v291 = vld [vmem:[%s1 + $0x30] sm:$0xff]
      %v292 = vld [vmem:[%s1 + $0x38] sm:$0xff]
      %v293 = vld [vmem:[%s2] sm:$0x1]
      %v295 = vlaneseq
      %v296 = vshrl.u32 %v295, 7
      %v297 = vsub.s32 0, %v296
      %v298 = vrot.slane %v293, %v297
      %vm300 = vcmask 523264
      %v302 = vsel %vm300, %v269, 0
      %v305 = vsel %vm300, %v270, 0
      %v308 = vsel %vm300, %v271, 0
      %v311 = vsel %vm300, %v272, 0
      %v314 = vsel %vm300, %v273, 0
      %v317 = vsel %vm300, %v274, 0
      %v320 = vsel %vm300, %v275, 0
      %v323 = vsel %vm300, %v276, 0
      %v326 = vsel %vm300, %v277, 0
      %v329 = vsel %vm300, %v278, 0
      %v332 = vsel %vm300, %v279, 0
      %v335 = vsel %vm300, %v280, 0
      %v338 = vsel %vm300, %v281, 0
      %v341 = vsel %vm300, %v282, 0
      %v344 = vsel %vm300, %v283, 0
      %v347 = vsel %vm300, %v284, 0
      %349 = vmatprep.subr.mxu0 0.0
      %350 = vmatpush1.msra.mxu0 %v285
      %351 = vmatprep.subr.mxu0 0.0
      %352 = vmatpush1.msra.mxu0 %v286
      %353 = vmatprep.subr.mxu0 0.0
      %354 = vmatpush1.msra.mxu0 %v287
      %355 = vmatprep.subr.mxu0 0.0
      %356 = vmatpush1.msra.mxu0 %v288
      %357 = vmatprep.subr.mxu0 0.0
      %358 = vmatpush1.msra.mxu0 %v289
      %359 = vmatprep.subr.mxu0 0.0
      %360 = vmatpush1.msra.mxu0 %v290
      %361 = vmatprep.subr.mxu0 0.0
      %362 = vmatpush1.msra.mxu0 %v291
      %363 = vmatprep.subr.mxu0 0.0
      %364 = vmatpush1.msra.mxu0 %v292
      %365 = vmatprep.subr.mxu0 0.0
      %366 = vmatpush1.msra.mxu0 0.0
      %367 = vmatprep.subr.mxu0 0.0
      %368 = vmatpush1.msra.mxu0 0.0
      %369 = vmatprep.subr.mxu0 0.0
      %370 = vmatpush1.msra.mxu0 0.0
      %371 = vmatprep.subr.mxu0 0.0
      %372 = vmatpush1.msra.mxu0 0.0
      %373 = vmatprep.subr.mxu0 0.0
      %374 = vmatpush1.msra.mxu0 0.0
      %375 = vmatprep.subr.mxu0 0.0
      %376 = vmatpush1.msra.mxu0 0.0
      %377 = vmatprep.subr.mxu0 0.0
      %378 = vmatpush1.msra.mxu0 0.0
      %379 = vmatprep.subr.mxu0 0.0
      %380 = vmatpush1.msra.mxu0 0.0
      %381 = vmatprep.subr.mxu0 0.0
      %382 = vmatpush1.msra.mxu0 0.0
      %383 = vmatprep.subr.mxu0 0.0
      %384 = vmatpush1.msra.mxu0 0.0
      %385 = vmatprep.subr.mxu0 0.0
      %386 = vmatpush1.msra.mxu0 0.0
      %387 = vmatprep.subr.mxu0 0.0
      %388 = vmatpush1.msra.mxu0 0.0
      %389 = vmatprep.subr.mxu0 0.0
      %390 = vmatpush1.msra.mxu0 0.0
      %391 = vmatprep.subr.mxu0 0.0
      %392 = vmatpush1.msra.mxu0 0.0
      %393 = vmatprep.subr.mxu0 0.0
      %394 = vmatpush1.msra.mxu0 0.0
      %395 = vmatprep.subr.mxu0 0.0
      %396 = vmatpush1.msra.mxu0 0.0
      %397 = vmatprep.subr.mxu0 0.0
      %398 = vmatpush1.msra.mxu0 0.0
      %399 = vmatprep.subr.mxu0 0.0
      %400 = vmatpush1.msra.mxu0 0.0
      %401 = vmatprep.subr.mxu0 0.0
      %402 = vmatpush1.msra.mxu0 0.0
      %403 = vmatprep.subr.mxu0 0.0
      %404 = vmatpush1.msra.mxu0 0.0
      %405 = vmatprep.subr.mxu0 0.0
      %406 = vmatpush1.msra.mxu0 0.0
      %407 = vmatprep.subr.mxu0 0.0
      %408 = vmatpush1.msra.mxu0 0.0
      %409 = vmatprep.subr.mxu0 0.0
      %410 = vmatpush1.msra.mxu0 0.0
      %411 = vmatprep.subr.mxu0 0.0
      %412 = vmatpush1.msra.mxu0 0.0
      %413 = vmatprep.mubr.f32.mxu0 0.0
      %414 = vmatmul.mubr.f32.gmra.mrb[0].mxu0 %v302
      %v415 = vpop.f32.mrb[0].mxu0
      %v416 = vadd.f32 %v298, %v415
      %v417 = vpop.f32.mrb[0].mxu0
      %418 = vmatprep.mubr.f32.mxu0 0.0
      %419 = vmatmul.mubr.f32.gmra.mrb[0].mxu0 %v305
      %v420 = vpop.f32.mrb[0].mxu0
      %v421 = vadd.f32 %v298, %v420
      %v422 = vpop.f32.mrb[0].mxu0
      %423 = vmatprep.mubr.f32.mxu0 0.0
      %424 = vmatmul.mubr.f32.gmra.mrb[0].mxu0 %v308
      %v425 = vpop.f32.mrb[0].mxu0
      %v426 = vadd.f32 %v298, %v425
      %v427 = vpop.f32.mrb[0].mxu0
      %428 = vmatprep.mubr.f32.mxu0 0.0
      %429 = vmatmul.mubr.f32.gmra.mrb[0].mxu0 %v311
      %v430 = vpop.f32.mrb[0].mxu0
      %v431 = vadd.f32 %v298, %v430
      %v432 = vpop.f32.mrb[0].mxu0
      %433 = vmatprep.mubr.f32.mxu0 0.0
      %434 = vmatmul.mubr.f32.gmra.mrb[0].mxu0 %v314
      %v435 = vpop.f32.mrb[0].mxu0
      %v436 = vadd.f32 %v298, %v435
      %v437 = vpop.f32.mrb[0].mxu0
      %438 = vmatprep.mubr.f32.mxu0 0.0
      %439 = vmatmul.mubr.f32.gmra.mrb[0].mxu0 %v317
      %v440 = vpop.f32.mrb[0].mxu0
      %v441 = vadd.f32 %v298, %v440
      %v442 = vpop.f32.mrb[0].mxu0
      %443 = vmatprep.mubr.f32.mxu0 0.0
      %444 = vmatmul.mubr.f32.gmra.mrb[0].mxu0 %v320
      %v445 = vpop.f32.mrb[0].mxu0
      %v446 = vadd.f32 %v298, %v445
      %v447 = vpop.f32.mrb[0].mxu0
      %448 = vmatprep.mubr.f32.mxu0 0.0
      %449 = vmatmul.mubr.f32.gmra.mrb[0].mxu0 %v323
      %v450 = vpop.f32.mrb[0].mxu0
      %v451 = vadd.f32 %v298, %v450
      %v452 = vpop.f32.mrb[0].mxu0
      %453 = vmatprep.mubr.f32.mxu0 0.0
      %454 = vmatmul.mubr.f32.gmra.mrb[0].mxu0 %v326
      %v455 = vpop.f32.mrb[0].mxu0
      %v456 = vadd.f32 %v298, %v455
      %v457 = vpop.f32.mrb[0].mxu0
      %458 = vmatprep.mubr.f32.mxu0 0.0
      %459 = vmatmul.mubr.f32.gmra.mrb[0].mxu0 %v329
      %v460 = vpop.f32.mrb[0].mxu0
      %v461 = vadd.f32 %v298, %v460
      %v462 = vpop.f32.mrb[0].mxu0
      %463 = vmatprep.mubr.f32.mxu0 0.0
      %464 = vmatmul.mubr.f32.gmra.mrb[0].mxu0 %v332
      %v465 = vpop.f32.mrb[0].mxu0
      %v466 = vadd.f32 %v298, %v465
      %v467 = vpop.f32.mrb[0].mxu0
      %468 = vmatprep.mubr.f32.mxu0 0.0
      %469 = vmatmul.mubr.f32.gmra.mrb[0].mxu0 %v335
      %v470 = vpop.f32.mrb[0].mxu0
      %v471 = vadd.f32 %v298, %v470
      %v472 = vpop.f32.mrb[0].mxu0
      %473 = vmatprep.mubr.f32.mxu0 0.0
      %474 = vmatmul.mubr.f32.gmra.mrb[0].mxu0 %v338
      %v475 = vpop.f32.mrb[0].mxu0
      %v476 = vadd.f32 %v298, %v475
      %v477 = vpop.f32.mrb[0].mxu0
      %478 = vmatprep.mubr.f32.mxu0 0.0
      %479 = vmatmul.mubr.f32.gmra.mrb[0].mxu0 %v341
      %v480 = vpop.f32.mrb[0].mxu0
      %v481 = vadd.f32 %v298, %v480
      %v482 = vpop.f32.mrb[0].mxu0
      %483 = vmatprep.mubr.f32.mxu0 0.0
      %484 = vmatmul.mubr.f32.gmra.mrb[0].mxu0 %v344
      %v485 = vpop.f32.mrb[0].mxu0
      %v486 = vadd.f32 %v298, %v485
      %v487 = vpop.f32.mrb[0].mxu0
      %488 = vmatprep.mubr.f32.mxu0 0.0
      %489 = vmatmul.mubr.f32.gmra.mrb[0].mxu0 %v347
      %v490 = vpop.f32.mrb[0].mxu0
      %v491 = vadd.f32 %v298, %v490
      %v492 = vpop.f32.mrb[0].mxu0
      %493 = vdwg.mxu0
      %494 = vst.msk [vmem:[%s261] sm:$0xff] %vm300, %v416
      %495 = vst.msk [vmem:[%s261 + $0x8] sm:$0xff] %vm300, %v421
      %496 = vst.msk [vmem:[%s261 + $0x10] sm:$0xff] %vm300, %v426
      %497 = vst.msk [vmem:[%s261 + $0x18] sm:$0xff] %vm300, %v431
      %498 = vst.msk [vmem:[%s261 + $0x20] sm:$0xff] %vm300, %v436
      %499 = vst.msk [vmem:[%s261 + $0x28] sm:$0xff] %vm300, %v441
      %500 = vst.msk [vmem:[%s261 + $0x30] sm:$0xff] %vm300, %v446
      %501 = vst.msk [vmem:[%s261 + $0x38] sm:$0xff] %vm300, %v451
      %502 = vst.msk [vmem:[%s261 + $0x40] sm:$0xff] %vm300, %v456
      %503 = vst.msk [vmem:[%s261 + $0x48] sm:$0xff] %vm300, %v461
      %504 = vst.msk [vmem:[%s261 + $0x50] sm:$0xff] %vm300, %v466
      %505 = vst.msk [vmem:[%s261 + $0x58] sm:$0xff] %vm300, %v471
      %506 = vst.msk [vmem:[%s261 + $0x60] sm:$0xff] %vm300, %v476
      %507 = vst.msk [vmem:[%s261 + $0x68] sm:$0xff] %vm300, %v481
      %508 = vst.msk [vmem:[%s261 + $0x70] sm:$0xff] %vm300, %v486
      %509 = vst.msk [vmem:[%s261 + $0x78] sm:$0xff] %vm300, %v491
      %v510 = vld [vmem:[%s3] sm:$0xff]
      %v511 = vld [vmem:[%s3 + $0x8] sm:$0xff]
      %v512 = vld [vmem:[%s3 + $0x10] sm:$0xff]
      %v513 = vld [vmem:[%s3 + $0x18] sm:$0xff]
      %v514 = vld [vmem:[%s3 + $0x20] sm:$0xff]
      %v515 = vld [vmem:[%s3 + $0x28] sm:$0xff]
      %v516 = vld [vmem:[%s3 + $0x30] sm:$0xff]
      %v517 = vld [vmem:[%s3 + $0x38] sm:$0xff]
      %v518 = vld [vmem:[%s4] sm:$0x1]
      %v520 = vlaneseq
      %v521 = vshrl.u32 %v520, 7
      %v522 = vsub.s32 0, %v521
      %v523 = vrot.slane %v518, %v522
      %v526 = vsel %vm300, %v416, 0
      %v529 = vsel %vm300, %v421, 0
      %v532 = vsel %vm300, %v426, 0
      %v535 = vsel %vm300, %v431, 0
      %v538 = vsel %vm300, %v436, 0
      %v541 = vsel %vm300, %v441, 0
      %v544 = vsel %vm300, %v446, 0
      %v547 = vsel %vm300, %v451, 0
      %v550 = vsel %vm300, %v456, 0
      %v553 = vsel %vm300, %v461, 0
      %v556 = vsel %vm300, %v466, 0
      %v559 = vsel %vm300, %v471, 0
      %v562 = vsel %vm300, %v476, 0
      %v565 = vsel %vm300, %v481, 0
      %v568 = vsel %vm300, %v486, 0
      %v571 = vsel %vm300, %v491, 0
      %573 = vmatprep.subr.mxu0 0.0
      %574 = vmatpush1.msra.mxu0 %v510
      %575 = vmatprep.subr.mxu0 0.0
      %576 = vmatpush1.msra.mxu0 %v511
      %577 = vmatprep.subr.mxu0 0.0
      %578 = vmatpush1.msra.mxu0 %v512
      %579 = vmatprep.subr.mxu0 0.0
      %580 = vmatpush1.msra.mxu0 %v513
      %581 = vmatprep.subr.mxu0 0.0
      %582 = vmatpush1.msra.mxu0 %v514
      %583 = vmatprep.subr.mxu0 0.0
      %584 = vmatpush1.msra.mxu0 %v515
      %585 = vmatprep.subr.mxu0 0.0
      %586 = vmatpush1.msra.mxu0 %v516
      %587 = vmatprep.subr.mxu0 0.0
      %588 = vmatpush1.msra.mxu0 %v517
      %589 = vmatprep.subr.mxu0 0.0
      %590 = vmatpush1.msra.mxu0 0.0
      %591 = vmatprep.subr.mxu0 0.0
      %592 = vmatpush1.msra.mxu0 0.0
      %593 = vmatprep.subr.mxu0 0.0
      %594 = vmatpush1.msra.mxu0 0.0
      %595 = vmatprep.subr.mxu0 0.0
      %596 = vmatpush1.msra.mxu0 0.0
      %597 = vmatprep.subr.mxu0 0.0
      %598 = vmatpush1.msra.mxu0 0.0
      %599 = vmatprep.subr.mxu0 0.0
      %600 = vmatpush1.msra.mxu0 0.0
      %601 = vmatprep.subr.mxu0 0.0
      %602 = vmatpush1.msra.mxu0 0.0
      %603 = vmatprep.subr.mxu0 0.0
      %604 = vmatpush1.msra.mxu0 0.0
      %605 = vmatprep.subr.mxu0 0.0
      %606 = vmatpush1.msra.mxu0 0.0
      %607 = vmatprep.subr.mxu0 0.0
      %608 = vmatpush1.msra.mxu0 0.0
      %609 = vmatprep.subr.mxu0 0.0
      %610 = vmatpush1.msra.mxu0 0.0
      %611 = vmatprep.subr.mxu0 0.0
      %612 = vmatpush1.msra.mxu0 0.0
      %613 = vmatprep.subr.mxu0 0.0
      %614 = vmatpush1.msra.mxu0 0.0
      %615 = vmatprep.subr.mxu0 0.0
      %616 = vmatpush1.msra.mxu0 0.0
      %617 = vmatprep.subr.mxu0 0.0
      %618 = vmatpush1.msra.mxu0 0.0
      %619 = vmatprep.subr.mxu0 0.0
      %620 = vmatpush1.msra.mxu0 0.0
      %621 = vmatprep.subr.mxu0 0.0
      %622 = vmatpush1.msra.mxu0 0.0
      %623 = vmatprep.subr.mxu0 0.0
      %624 = vmatpush1.msra.mxu0 0.0
      %625 = vmatprep.subr.mxu0 0.0
      %626 = vmatpush1.msra.mxu0 0.0
      %627 = vmatprep.subr.mxu0 0.0
      %628 = vmatpush1.msra.mxu0 0.0
      %629 = vmatprep.subr.mxu0 0.0
      %630 = vmatpush1.msra.mxu0 0.0
      %631 = vmatprep.subr.mxu0 0.0
      %632 = vmatpush1.msra.mxu0 0.0
      %633 = vmatprep.subr.mxu0 0.0
      %634 = vmatpush1.msra.mxu0 0.0
      %635 = vmatprep.subr.mxu0 0.0
      %636 = vmatpush1.msra.mxu0 0.0
      %637 = vmatprep.mubr.f32.mxu0 0.0
      %638 = vmatmul.mubr.f32.gmra.mrb[0].mxu0 %v526
      %v639 = vpop.f32.mrb[0].mxu0
      %v640 = vadd.f32 %v523, %v639
      %v641 = vpop.f32.mrb[0].mxu0
      %642 = vmatprep.mubr.f32.mxu0 0.0
      %643 = vmatmul.mubr.f32.gmra.mrb[0].mxu0 %v529
      %v644 = vpop.f32.mrb[0].mxu0
      %v645 = vadd.f32 %v523, %v644
      %v646 = vpop.f32.mrb[0].mxu0
      %647 = vmatprep.mubr.f32.mxu0 0.0
      %648 = vmatmul.mubr.f32.gmra.mrb[0].mxu0 %v532
      %v649 = vpop.f32.mrb[0].mxu0
      %v650 = vadd.f32 %v523, %v649
      %v651 = vpop.f32.mrb[0].mxu0
      %652 = vmatprep.mubr.f32.mxu0 0.0
      %653 = vmatmul.mubr.f32.gmra.mrb[0].mxu0 %v535
      %v654 = vpop.f32.mrb[0].mxu0
      %v655 = vadd.f32 %v523, %v654
      %v656 = vpop.f32.mrb[0].mxu0
      %657 = vmatprep.mubr.f32.mxu0 0.0
      %658 = vmatmul.mubr.f32.gmra.mrb[0].mxu0 %v538
      %v659 = vpop.f32.mrb[0].mxu0
      %v660 = vadd.f32 %v523, %v659
      %v661 = vpop.f32.mrb[0].mxu0
      %662 = vmatprep.mubr.f32.mxu0 0.0
      %663 = vmatmul.mubr.f32.gmra.mrb[0].mxu0 %v541
      %v664 = vpop.f32.mrb[0].mxu0
      %v665 = vadd.f32 %v523, %v664
      %v666 = vpop.f32.mrb[0].mxu0
      %667 = vmatprep.mubr.f32.mxu0 0.0
      %668 = vmatmul.mubr.f32.gmra.mrb[0].mxu0 %v544
      %v669 = vpop.f32.mrb[0].mxu0
      %v670 = vadd.f32 %v523, %v669
      %v671 = vpop.f32.mrb[0].mxu0
      %672 = vmatprep.mubr.f32.mxu0 0.0
      %673 = vmatmul.mubr.f32.gmra.mrb[0].mxu0 %v547
      %v674 = vpop.f32.mrb[0].mxu0
      %v675 = vadd.f32 %v523, %v674
      %v676 = vpop.f32.mrb[0].mxu0
      %677 = vmatprep.mubr.f32.mxu0 0.0
      %678 = vmatmul.mubr.f32.gmra.mrb[0].mxu0 %v550
      %v679 = vpop.f32.mrb[0].mxu0
      %v680 = vadd.f32 %v523, %v679
      %v681 = vpop.f32.mrb[0].mxu0
      %682 = vmatprep.mubr.f32.mxu0 0.0
      %683 = vmatmul.mubr.f32.gmra.mrb[0].mxu0 %v553
      %v684 = vpop.f32.mrb[0].mxu0
      %v685 = vadd.f32 %v523, %v684
      %v686 = vpop.f32.mrb[0].mxu0
      %687 = vmatprep.mubr.f32.mxu0 0.0
      %688 = vmatmul.mubr.f32.gmra.mrb[0].mxu0 %v556
      %v689 = vpop.f32.mrb[0].mxu0
      %v690 = vadd.f32 %v523, %v689
      %v691 = vpop.f32.mrb[0].mxu0
      %692 = vmatprep.mubr.f32.mxu0 0.0
      %693 = vmatmul.mubr.f32.gmra.mrb[0].mxu0 %v559
      %v694 = vpop.f32.mrb[0].mxu0
      %v695 = vadd.f32 %v523, %v694
      %v696 = vpop.f32.mrb[0].mxu0
      %697 = vmatprep.mubr.f32.mxu0 0.0
      %698 = vmatmul.mubr.f32.gmra.mrb[0].mxu0 %v562
      %v699 = vpop.f32.mrb[0].mxu0
      %v700 = vadd.f32 %v523, %v699
      %v701 = vpop.f32.mrb[0].mxu0
      %702 = vmatprep.mubr.f32.mxu0 0.0
      %703 = vmatmul.mubr.f32.gmra.mrb[0].mxu0 %v565
      %v704 = vpop.f32.mrb[0].mxu0
      %v705 = vadd.f32 %v523, %v704
      %v706 = vpop.f32.mrb[0].mxu0
      %707 = vmatprep.mubr.f32.mxu0 0.0
      %708 = vmatmul.mubr.f32.gmra.mrb[0].mxu0 %v568
      %v709 = vpop.f32.mrb[0].mxu0
      %v710 = vadd.f32 %v523, %v709
      %v711 = vpop.f32.mrb[0].mxu0
      %712 = vmatprep.mubr.f32.mxu0 0.0
      %713 = vmatmul.mubr.f32.gmra.mrb[0].mxu0 %v571
      %v714 = vpop.f32.mrb[0].mxu0
      %v715 = vadd.f32 %v523, %v714
      %v716 = vpop.f32.mrb[0].mxu0
      %717 = vdwg.mxu0
      %vm718 = vcmask 261120
      %719 = vst.msk [vmem:[%s267] sm:$0xff] %vm718, %v640
      %720 = vst.msk [vmem:[%s267 + $0x8] sm:$0xff] %vm718, %v645
      %721 = vst.msk [vmem:[%s267 + $0x10] sm:$0xff] %vm718, %v650
      %722 = vst.msk [vmem:[%s267 + $0x18] sm:$0xff] %vm718, %v655
      %723 = vst.msk [vmem:[%s267 + $0x20] sm:$0xff] %vm718, %v660
      %724 = vst.msk [vmem:[%s267 + $0x28] sm:$0xff] %vm718, %v665
      %725 = vst.msk [vmem:[%s267 + $0x30] sm:$0xff] %vm718, %v670
      %726 = vst.msk [vmem:[%s267 + $0x38] sm:$0xff] %vm718, %v675
      %727 = vst.msk [vmem:[%s267 + $0x40] sm:$0xff] %vm718, %v680
      %728 = vst.msk [vmem:[%s267 + $0x48] sm:$0xff] %vm718, %v685
      %729 = vst.msk [vmem:[%s267 + $0x50] sm:$0xff] %vm718, %v690
      %730 = vst.msk [vmem:[%s267 + $0x58] sm:$0xff] %vm718, %v695
      %731 = vst.msk [vmem:[%s267 + $0x60] sm:$0xff] %vm718, %v700
      %732 = vst.msk [vmem:[%s267 + $0x68] sm:$0xff] %vm718, %v705
      %733 = vst.msk [vmem:[%s267 + $0x70] sm:$0xff] %vm718, %v710
      %734 = vst.msk [vmem:[%s267 + $0x78] sm:$0xff] %vm718, %v715
      %s735 = smul.u32 16, %s18
      %p736 = scmp.lt.s32.totalorder %s735, 31
      %s737 = scalar_select %p736, %s735, 31
      %s738 = smul.addr %s737, 8
      %s739 = scalar_lea.vmem %s5, %s738
      %s740 = smul.u32 16, %s18
      %p741 = scmp.lt.s32.totalorder %s740, 31
      %s742 = scalar_select %p741, %s740, 31
      %s743 = smul.addr %s742, 8
      %s744 = scalar_lea.vmem %s6, %s743
      // Predicated region
      $region41: #{tpu_custom_call.1} parent=39 // pred_check
        %p745 = pneg %p146
      $region42: #{tpu_custom_call.1} parent=39 // pred_check_branch
        %747 = sbr.rel (%p745) target = $region44
      $region43: #{tpu_custom_call.1} parent=39 // pred_region
        %s748 = smul.u32 16, %s18
      $region44: #{tpu_custom_call.1} parent=39 // pred_fallthru
        _
      // Predicated region
      $region45: #{tpu_custom_call.1} parent=39 // pred_check
        %p749 = pneg %p172
      $region46: #{tpu_custom_call.1} parent=39 // pred_check_branch
        %751 = sbr.rel (%p749) target = $region48
      $region47: #{tpu_custom_call.1} parent=39 // pred_region
        %s752 = smul.u32 16, %s18
      $region48: #{tpu_custom_call.1} parent=39 // pred_fallthru
        _
    $region40: #{tpu_custom_call.1} parent=5 // pred_fallthru
      _
    %p753 = scmp.le.s32.totalorder 2, %s13
    // Predicated region
    $region49: #{tpu_custom_call.1} parent=5 // pred_check
      %p754 = pneg %p753
    $region50: #{tpu_custom_call.1} parent=5 // pred_check_branch
      %756 = sbr.rel (%p754) target = $region52
    $region51: #{tpu_custom_call.1} parent=5 // pred_region
      %s757 = ssub.s32 %s13, 2
      // Predicated region
      $region53: #{tpu_custom_call.1} parent=51 // pred_check
        %p758 = pneg %p152
      $region54: #{tpu_custom_call.1} parent=51 // pred_check_branch
        %760 = sbr.rel (%p758) target = $region56
      $region55: #{tpu_custom_call.1} parent=51 // pred_region
        %s761 = smul.u32 16, %s19
        %p762 = scmp.lt.s32.totalorder %s761, 31
        %s763 = scalar_select %p762, %s761, 31
        %s764 = smul.addr %s763, 8
        %s765 = scalar_lea.vmem %s5, %s764
      $region56: #{tpu_custom_call.1} parent=51 // pred_fallthru
        _
      // Predicated region
      $region57: #{tpu_custom_call.1} parent=51 // pred_check
        %p766 = pneg %p178
      $region58: #{tpu_custom_call.1} parent=51 // pred_check_branch
        %768 = sbr.rel (%p766) target = $region60
      $region59: #{tpu_custom_call.1} parent=51 // pred_region
        %s769 = smul.u32 16, %s19
        %p770 = scmp.lt.s32.totalorder %s769, 31
        %s771 = scalar_select %p770, %s769, 31
        %s772 = smul.addr %s771, 8
        %s773 = scalar_lea.vmem %s6, %s772
      $region60: #{tpu_custom_call.1} parent=51 // pred_fallthru
        _
    $region52: #{tpu_custom_call.1} parent=5 // pred_fallthru
      _
  $region6: #{tpu_custom_call.1} parent=0 // loop_footer
    %s17 = sadd.s32 1, %s13
  $region7: #{tpu_custom_call.1} parent=0 // loop_footer_branch
    %12 = sbr.rel target = $region3
  $region8: #{tpu_custom_call.1} parent=0 // loop_exit
    _

</llo_original>
